<compile_context>
chip_gen: v6e
topology: v6e:2x2x1
jax: 0.10.0
libtpu: 0.0.40
codegen_flags: <defaults>
</compile_context>

<pallas_src>
import jax
import jax.numpy as jnp
from jax.experimental import pallas as pl
from jax.experimental.pallas import tpu as pltpu

SIZE = 128  # hidden width from the PyTorch module ("size = 128")


def _fast_mish(x):
    """Mish via a single exp.

    mish(x) = x * tanh(softplus(x)) = x * ((1+e)^2 - 1) / ((1+e)^2 + 1), e = exp(x).
    Clamp the exp argument: for x > 20, (s-1)/(s+1) == 1.0 in f32, so the
    clamped formula already returns x exactly (no inf/NaN possible).
    """
    e = jnp.exp(jnp.minimum(x, 20.0))
    s = (1.0 + e) * (1.0 + e)
    return x * (s - 1.0) * pl.reciprocal(s + 1.0, approx=True)


def accel_mlp_kernel(x_ref, w1_ref, b1_ref, w2_ref, b2_ref, w3_ref, b3_ref, o_ref):
    x = x_ref[...]                       # (tb, in)  compute dtype (bf16 default)
    w1 = w1_ref[...]
    w2 = w2_ref[...]
    w3 = w3_ref[...]
    # Load biases once as f32 rows (broadcast in the adds below).
    b1 = b1_ref[...]
    b2 = b2_ref[...]
    b3 = b3_ref[...]

    # Layer 1: Linear(input_size, 128) + Mish   (Dropout -> identity, eval mode)
    h1 = jnp.dot(x, w1, preferred_element_type=jnp.float32) + b1
    h1 = _fast_mish(h1)

    # Layer 2: Linear(128, 64) + Mish           (Dropout -> identity, eval mode)
    h2 = jnp.dot(h1.astype(w2.dtype), w2, preferred_element_type=jnp.float32) + b2
    h2 = _fast_mish(h2)

    # Layer 3: Linear(64, output_size) + Tanh
    h3 = jnp.dot(h2.astype(w3.dtype), w3, preferred_element_type=jnp.float32) + b3
    o_ref[...] = jnp.tanh(h3).astype(o_ref.dtype)


def _pick_batch_tile(B):
    # Large enough to amortize per-step overhead (~0.35us) and hide HBM traffic,
    # small enough that x/h1/h2/out comfortably fit v7x's 64 MiB VMEM
    # (tb=1024 f32 intermediates ~ <1 MiB).  Multiples of 16 keep bf16 sublane
    # packing happy; falling back to the full batch is always a legal block.
    for tb in (1024, 512, 256, 128, 64, 32, 16):
        if B % tb == 0:
            return tb
    return B


def acceleration_network(x, params, *, batch_tile=None, compute_dtype=jnp.bfloat16):
    """Fused forward pass of AccelerationNetwork.

    x: (B, input_size) float32
    params: dict with w1 (in,128), b1 (1,128), w2 (128,64), b2 (1,64),
            w3 (64,out), b3 (1,out)   (weights pre-transposed: y = x @ W + b)
    compute_dtype: dtype used for MXU operands (bf16 default; accumulation and
                   activation math stay f32).
    """
    w1, b1, w2, b2, w3, b3 = (params[k] for k in ("w1", "b1", "w2", "b2", "w3", "b3"))
    B, in_size = x.shape
    out_size = w3.shape[1]

    xq = x.astype(compute_dtype)
    w1q, w2q, w3q = (w.astype(compute_dtype) for w in (w1, w2, w3))
    b1f, b2f, b3f = (b.astype(jnp.float32) for b in (b1, b2, b3))

    tb = batch_tile or _pick_batch_tile(B)
    assert B % tb == 0, f"batch_tile {tb} must divide batch {B}"
    grid = (B // tb,)

    def resident(arr):
        # Whole array, same block every grid step -> stays VMEM-resident
        # (not re-DMA'd per step).
        return pl.BlockSpec(arr.shape, lambda i: (0, 0))

    return pl.pallas_call(
        accel_mlp_kernel,
        out_shape=jax.ShapeDtypeStruct((B, out_size), x.dtype),
        grid=grid,
        in_specs=[
            pl.BlockSpec((tb, in_size), lambda i: (i, 0)),   # x tile (pipelined)
            resident(w1q), resident(b1f),
            resident(w2q), resident(b2f),
            resident(w3q), resident(b3f),
        ],
        out_specs=pl.BlockSpec((tb, out_size), lambda i: (i, 0)),
        compiler_params=pltpu.CompilerParams(
            dimension_semantics=("parallel",),   # batch axis shards across TCs (v7x)
        ),
    )(xq, w1q, b1f, w2q, b2f, w3q, b3f)


def init_params(key, input_size, output_size):
    """Deterministic synthetic parameter init (uniform, Linear-style fan-in scale)."""
    ks = jax.random.split(key, 6)

    def linear(kw, kb, fan_in, fan_out):
        bound = 1.0 / jnp.sqrt(fan_in)
        w = jax.random.uniform(kw, (fan_in, fan_out), jnp.float32, -bound, bound)
        b = jax.random.uniform(kb, (1, fan_out), jnp.float32, -bound, bound)
        return w, b

    w1, b1 = linear(ks[0], ks[1], input_size, SIZE)
    w2, b2 = linear(ks[2], ks[3], SIZE, SIZE // 2)
    w3, b3 = linear(ks[4], ks[5], SIZE // 2, output_size)
    return {"w1": w1, "b1": b1, "w2": w2, "b2": b2, "w3": w3, "b3": b3}


def reference_forward(x, p):
    """Pure-JAX reference with exact Mish (matches PyTorch eval-mode forward)."""
    def mish(v):
        return v * jnp.tanh(jax.nn.softplus(v))
    h = mish(x @ p["w1"] + p["b1"])
    h = mish(h @ p["w2"] + p["b2"])
    return jnp.tanh(h @ p["w3"] + p["b3"])


if __name__ == "__main__":
    key = jax.random.PRNGKey(0)
    k_x, k_p, k_x2 = jax.random.split(key, 3)

    input_size, output_size = 32, 16
    params = init_params(k_p, input_size, output_size)

    # 1) Small batch, f32 MXU operands: tight check of the fused math
    #    (fast-Mish + approx reciprocal) against the exact reference.
    x_small = jax.random.normal(k_x, (8, input_size), jnp.float32)
    out_f32 = jax.block_until_ready(
        acceleration_network(x_small, params, compute_dtype=jnp.float32))
    ref_small = reference_forward(x_small, params)
    assert out_f32.shape == (8, output_size)
    assert jnp.allclose(out_f32, ref_small, atol=1e-2, rtol=1e-2), \
        "f32-path mismatch vs JAX reference"

    # 2) Multi-step grid (batch_tile=16 -> grid=(4,)), default bf16 MXU operands.
    x_big = jax.random.normal(k_x2, (64, input_size), jnp.float32)
    out_bf16 = jax.block_until_ready(
        acceleration_network(x_big, params, batch_tile=16))
    ref_big = reference_forward(x_big, params)
    assert out_bf16.shape == (64, output_size)
    assert jnp.allclose(out_bf16, ref_big, atol=3e-2, rtol=3e-2), \
        "bf16-path mismatch vs JAX reference"

    print("KERNEL_OK")
</pallas_src>

<mosaic_0001>
module attributes {stable_mosaic.version = 11 : i64} {
  func.func @accel_mlp_kernel(%arg0: i32, %arg1: memref<8x32xf32, #tpu.memory_space<vmem>>, %arg2: memref<32x128xf32, #tpu.memory_space<vmem>>, %arg3: memref<1x128xf32, #tpu.memory_space<vmem>>, %arg4: memref<128x64xf32, #tpu.memory_space<vmem>>, %arg5: memref<1x64xf32, #tpu.memory_space<vmem>>, %arg6: memref<64x16xf32, #tpu.memory_space<vmem>>, %arg7: memref<1x16xf32, #tpu.memory_space<vmem>>, %arg8: memref<8x16xf32, #tpu.memory_space<vmem>>) attributes {dimension_semantics = [#tpu.dimension_semantics<parallel>], iteration_bounds = array<i64: 1>, scalar_prefetch = 0 : i64, scratch_operands = 0 : i64, tpu.core_type = #tpu.core_type<tc>, window_params = [{transform_indices = @transform_0, window_bounds = array<i64: 8, 32>}, {pipeline_mode = #tpu.pipeline_mode<synchronous>, transform_indices = @transform_1, window_bounds = array<i64: 32, 128>}, {pipeline_mode = #tpu.pipeline_mode<synchronous>, transform_indices = @transform_2, window_bounds = array<i64: 1, 128>}, {pipeline_mode = #tpu.pipeline_mode<synchronous>, transform_indices = @transform_3, window_bounds = array<i64: 128, 64>}, {pipeline_mode = #tpu.pipeline_mode<synchronous>, transform_indices = @transform_4, window_bounds = array<i64: 1, 64>}, {pipeline_mode = #tpu.pipeline_mode<synchronous>, transform_indices = @transform_5, window_bounds = array<i64: 64, 16>}, {pipeline_mode = #tpu.pipeline_mode<synchronous>, transform_indices = @transform_6, window_bounds = array<i64: 1, 16>}, {transform_indices = @transform_7, window_bounds = array<i64: 8, 16>}]} {
    %c0 = arith.constant 0 : index
    %c0_0 = arith.constant 0 : index
    %0 = vector.load %arg1[%c0, %c0_0] : memref<8x32xf32, #tpu.memory_space<vmem>>, vector<8x32xf32>
    %c0_1 = arith.constant 0 : index
    %c0_2 = arith.constant 0 : index
    %1 = vector.load %arg2[%c0_1, %c0_2] : memref<32x128xf32, #tpu.memory_space<vmem>>, vector<32x128xf32>
    %c0_3 = arith.constant 0 : index
    %c0_4 = arith.constant 0 : index
    %2 = vector.load %arg4[%c0_3, %c0_4] : memref<128x64xf32, #tpu.memory_space<vmem>>, vector<128x64xf32>
    %c0_5 = arith.constant 0 : index
    %c0_6 = arith.constant 0 : index
    %3 = vector.load %arg6[%c0_5, %c0_6] : memref<64x16xf32, #tpu.memory_space<vmem>>, vector<64x16xf32>
    %c0_7 = arith.constant 0 : index
    %c0_8 = arith.constant 0 : index
    %4 = vector.load %arg3[%c0_7, %c0_8] : memref<1x128xf32, #tpu.memory_space<vmem>>, vector<1x128xf32>
    %c0_9 = arith.constant 0 : index
    %c0_10 = arith.constant 0 : index
    %5 = vector.load %arg5[%c0_9, %c0_10] : memref<1x64xf32, #tpu.memory_space<vmem>>, vector<1x64xf32>
    %c0_11 = arith.constant 0 : index
    %c0_12 = arith.constant 0 : index
    %6 = vector.load %arg7[%c0_11, %c0_12] : memref<1x16xf32, #tpu.memory_space<vmem>>, vector<1x16xf32>
    %cst = arith.constant dense<0.000000e+00> : vector<8x128xf32>
    %7 = tpu.matmul %0, %1, %cst {dimension_numbers = #tpu.dot_dimension_numbers<[1], [0], [0], [1], [0, 0, 1, 1], [], []>} : vector<8x32xf32>, vector<32x128xf32>, vector<8x128xf32> -> vector<8x128xf32>
    %8 = vector.broadcast %4 : vector<1x128xf32> to vector<8x128xf32>
    %9 = arith.addf %7, %8 : vector<8x128xf32>
    %cst_13 = arith.constant 2.000000e+01 : f32
    %10 = vector.broadcast %cst_13 : f32 to vector<8x128xf32>
    %11 = arith.minimumf %9, %10 : vector<8x128xf32>
    %12 = math.exp %11 : vector<8x128xf32>
    %cst_14 = arith.constant 1.000000e+00 : f32
    %13 = vector.broadcast %cst_14 : f32 to vector<8x128xf32>
    %14 = arith.addf %13, %12 : vector<8x128xf32>
    %cst_15 = arith.constant 1.000000e+00 : f32
    %15 = vector.broadcast %cst_15 : f32 to vector<8x128xf32>
    %16 = arith.addf %15, %12 : vector<8x128xf32>
    %17 = arith.mulf %14, %16 : vector<8x128xf32>
    %cst_16 = arith.constant 1.000000e+00 : f32
    %18 = vector.broadcast %cst_16 : f32 to vector<8x128xf32>
    %19 = arith.subf %17, %18 : vector<8x128xf32>
    %20 = arith.mulf %9, %19 : vector<8x128xf32>
    %cst_17 = arith.constant 1.000000e+00 : f32
    %21 = vector.broadcast %cst_17 : f32 to vector<8x128xf32>
    %22 = arith.addf %17, %21 : vector<8x128xf32>
    %23 = tpu.reciprocal %22 {approx = true} : vector<8x128xf32> -> vector<8x128xf32>
    %24 = arith.mulf %20, %23 : vector<8x128xf32>
    %cst_18 = arith.constant dense<0.000000e+00> : vector<8x64xf32>
    %25 = tpu.matmul %24, %2, %cst_18 {dimension_numbers = #tpu.dot_dimension_numbers<[1], [0], [0], [1], [0, 0, 1, 1], [], []>} : vector<8x128xf32>, vector<128x64xf32>, vector<8x64xf32> -> vector<8x64xf32>
    %26 = vector.broadcast %5 : vector<1x64xf32> to vector<8x64xf32>
    %27 = arith.addf %25, %26 : vector<8x64xf32>
    %cst_19 = arith.constant 2.000000e+01 : f32
    %28 = vector.broadcast %cst_19 : f32 to vector<8x64xf32>
    %29 = arith.minimumf %27, %28 : vector<8x64xf32>
    %30 = math.exp %29 : vector<8x64xf32>
    %cst_20 = arith.constant 1.000000e+00 : f32
    %31 = vector.broadcast %cst_20 : f32 to vector<8x64xf32>
    %32 = arith.addf %31, %30 : vector<8x64xf32>
    %cst_21 = arith.constant 1.000000e+00 : f32
    %33 = vector.broadcast %cst_21 : f32 to vector<8x64xf32>
    %34 = arith.addf %33, %30 : vector<8x64xf32>
    %35 = arith.mulf %32, %34 : vector<8x64xf32>
    %cst_22 = arith.constant 1.000000e+00 : f32
    %36 = vector.broadcast %cst_22 : f32 to vector<8x64xf32>
    %37 = arith.subf %35, %36 : vector<8x64xf32>
    %38 = arith.mulf %27, %37 : vector<8x64xf32>
    %cst_23 = arith.constant 1.000000e+00 : f32
    %39 = vector.broadcast %cst_23 : f32 to vector<8x64xf32>
    %40 = arith.addf %35, %39 : vector<8x64xf32>
    %41 = tpu.reciprocal %40 {approx = true} : vector<8x64xf32> -> vector<8x64xf32>
    %42 = arith.mulf %38, %41 : vector<8x64xf32>
    %cst_24 = arith.constant dense<0.000000e+00> : vector<8x16xf32>
    %43 = tpu.matmul %42, %3, %cst_24 {dimension_numbers = #tpu.dot_dimension_numbers<[1], [0], [0], [1], [0, 0, 1, 1], [], []>} : vector<8x64xf32>, vector<64x16xf32>, vector<8x16xf32> -> vector<8x16xf32>
    %44 = vector.broadcast %6 : vector<1x16xf32> to vector<8x16xf32>
    %45 = arith.addf %43, %44 : vector<8x16xf32>
    %46 = math.tanh %45 : vector<8x16xf32>
    %c0_25 = arith.constant 0 : index
    %c0_26 = arith.constant 0 : index
    %47 = vector.load %arg8[%c0_25, %c0_26] : memref<8x16xf32, #tpu.memory_space<vmem>>, vector<8x16xf32>
    tpu.vector_store %arg8[%c0_25, %c0_26], %46 {strides = array<i32>} : memref<8x16xf32, #tpu.memory_space<vmem>>, vector<8x16xf32>,
    return
  }
  func.func @transform_0(%arg0: i32) -> (i32, i32) {
    %c0_i32 = arith.constant 0 : i32
    %c0_i32_0 = arith.constant 0 : i32
    return %arg0, %c0_i32 : i32, i32
  }
  func.func @transform_1(%arg0: i32) -> (i32, i32) {
    %c0_i32 = arith.constant 0 : i32
    %c0_i32_0 = arith.constant 0 : i32
    %c0_i32_1 = arith.constant 0 : i32
    return %c0_i32, %c0_i32_0 : i32, i32
  }
  func.func @transform_2(%arg0: i32) -> (i32, i32) {
    %c0_i32 = arith.constant 0 : i32
    %c0_i32_0 = arith.constant 0 : i32
    %c0_i32_1 = arith.constant 0 : i32
    return %c0_i32, %c0_i32_0 : i32, i32
  }
  func.func @transform_3(%arg0: i32) -> (i32, i32) {
    %c0_i32 = arith.constant 0 : i32
    %c0_i32_0 = arith.constant 0 : i32
    %c0_i32_1 = arith.constant 0 : i32
    return %c0_i32, %c0_i32_0 : i32, i32
  }
  func.func @transform_4(%arg0: i32) -> (i32, i32) {
    %c0_i32 = arith.constant 0 : i32
    %c0_i32_0 = arith.constant 0 : i32
    %c0_i32_1 = arith.constant 0 : i32
    return %c0_i32, %c0_i32_0 : i32, i32
  }
  func.func @transform_5(%arg0: i32) -> (i32, i32) {
    %c0_i32 = arith.constant 0 : i32
    %c0_i32_0 = arith.constant 0 : i32
    %c0_i32_1 = arith.constant 0 : i32
    return %c0_i32, %c0_i32_0 : i32, i32
  }
  func.func @transform_6(%arg0: i32) -> (i32, i32) {
    %c0_i32 = arith.constant 0 : i32
    %c0_i32_0 = arith.constant 0 : i32
    %c0_i32_1 = arith.constant 0 : i32
    return %c0_i32, %c0_i32_0 : i32, i32
  }
  func.func @transform_7(%arg0: i32) -> (i32, i32) {
    %c0_i32 = arith.constant 0 : i32
    %c0_i32_0 = arith.constant 0 : i32
    return %arg0, %c0_i32 : i32, i32
  }
}

</mosaic_0001>

<llo_original>
// kernel: tpu_custom_call.1
$region0: #{tpu_custom_call.1}
  #allocation0 [shape = 'u32[]', space=smem, size = 0x4, offset = 0x4, fixed_abs, tag = 'smem constant byte address 0x4 - core index']
  #allocation1 [shape = 'u32[144,128]{1,0:T(1,128)}', space=vmem, size = 0x12000, scoped, tag = 'internal scratch']
  %s0 = inlined_call_operand.vmem [shape: f32[8,32], index: 0, kind: input, shape index: {}]
  %s1 = inlined_call_operand.vmem [shape: f32[32,128], index: 1, kind: input, shape index: {}]
  %s2 = inlined_call_operand.vmem [shape: f32[1,128], index: 2, kind: input, shape index: {}]
  %s3 = inlined_call_operand.vmem [shape: f32[128,64], index: 3, kind: input, shape index: {}]
  %s4 = inlined_call_operand.vmem [shape: f32[1,64], index: 4, kind: input, shape index: {}]
  %s5 = inlined_call_operand.vmem [shape: f32[64,16], index: 5, kind: input, shape index: {}]
  %s6 = inlined_call_operand.vmem [shape: f32[1,16], index: 6, kind: input, shape index: {}]
  %s7 = inlined_call_operand.hbm [shape: f32[8,16], index: 7, kind: output, shape index: {}]
  %s8 = sld [smem:[#allocation0]]
  $region38: #{tpu_custom_call.1} parent=0
    _
  %s10 = ssub.s32 1, %s8
  %s11 = scalar_select 0, %s10, %s8
  $region1: #{tpu_custom_call.1} parent=0
    #allocation2 [shape = 'u8[4096]{0}', space=vmem, size = 0x1000, scoped, tag = 'output window, operand 0, single buffered']
    #allocation3 [shape = 's32[1]{0}', space=sflag, size = 0x4, scoped, tag = 'scoped memory for tpu_custom_call.1']
    %12 = vsyncpa [#allocation3], 0
    // Predicated region
    $region2: #{tpu_custom_call.1} parent=1 // pred_check
      _
    $region3: #{tpu_custom_call.1} parent=1 // pred_check_branch
      %14 = sbr.rel (0) target = $region5
    $region4: #{tpu_custom_call.1} parent=1 // pred_region
      _
    $region5: #{tpu_custom_call.1} parent=1 // pred_fallthru
      _
    // Predicated region
    $region6: #{tpu_custom_call.1} parent=1 // pred_check
      _
    $region7: #{tpu_custom_call.1} parent=1 // pred_check_branch
      %16 = sbr.rel (0) target = $region9
    $region8: #{tpu_custom_call.1} parent=1 // pred_region
      _
    $region9: #{tpu_custom_call.1} parent=1 // pred_fallthru
      _
    // Predicated region
    $region10: #{tpu_custom_call.1} parent=1 // pred_check
      _
    $region11: #{tpu_custom_call.1} parent=1 // pred_check_branch
      %18 = sbr.rel (0) target = $region13
    $region12: #{tpu_custom_call.1} parent=1 // pred_region
      _
    $region13: #{tpu_custom_call.1} parent=1 // pred_fallthru
      _
    // Predicated region
    $region14: #{tpu_custom_call.1} parent=1 // pred_check
      _
    $region15: #{tpu_custom_call.1} parent=1 // pred_check_branch
      %20 = sbr.rel (0) target = $region17
    $region16: #{tpu_custom_call.1} parent=1 // pred_region
      _
    $region17: #{tpu_custom_call.1} parent=1 // pred_fallthru
      _
    // Predicated region
    $region18: #{tpu_custom_call.1} parent=1 // pred_check
      _
    $region19: #{tpu_custom_call.1} parent=1 // pred_check_branch
      %22 = sbr.rel (0) target = $region21
    $region20: #{tpu_custom_call.1} parent=1 // pred_region
      _
    $region21: #{tpu_custom_call.1} parent=1 // pred_fallthru
      _
    // Predicated region
    $region22: #{tpu_custom_call.1} parent=1 // pred_check
      _
    $region23: #{tpu_custom_call.1} parent=1 // pred_check_branch
      %24 = sbr.rel (0) target = $region25
    $region24: #{tpu_custom_call.1} parent=1 // pred_region
      _
    $region25: #{tpu_custom_call.1} parent=1 // pred_fallthru
      _
    // Predicated region
    $region26: #{tpu_custom_call.1} parent=1 // pred_check
      _
    $region27: #{tpu_custom_call.1} parent=1 // pred_check_branch
      %26 = sbr.rel (0) target = $region29
    $region28: #{tpu_custom_call.1} parent=1 // pred_region
      _
    $region29: #{tpu_custom_call.1} parent=1 // pred_fallthru
      _
    %v27 = vld [vmem:[%s0] sm:$0xff]
    %v28 = vld [vmem:[%s1] sm:$0xff]
    %v29 = vld [vmem:[%s1 + $0x8] sm:$0xff]
    %v30 = vld [vmem:[%s1 + $0x10] sm:$0xff]
    %v31 = vld [vmem:[%s1 + $0x18] sm:$0xff]
    %v32 = vld [vmem:[%s3] sm:$0xff]
    %v33 = vld [vmem:[%s3 + $0x8] sm:$0xff]
    %v34 = vld [vmem:[%s3 + $0x10] sm:$0xff]
    %v35 = vld [vmem:[%s3 + $0x18] sm:$0xff]
    %v36 = vld [vmem:[%s3 + $0x20] sm:$0xff]
    %v37 = vld [vmem:[%s3 + $0x28] sm:$0xff]
    %v38 = vld [vmem:[%s3 + $0x30] sm:$0xff]
    %v39 = vld [vmem:[%s3 + $0x38] sm:$0xff]
    %v40 = vld [vmem:[%s3 + $0x40] sm:$0xff]
    %v41 = vld [vmem:[%s3 + $0x48] sm:$0xff]
    %v42 = vld [vmem:[%s3 + $0x50] sm:$0xff]
    %v43 = vld [vmem:[%s3 + $0x58] sm:$0xff]
    %v44 = vld [vmem:[%s3 + $0x60] sm:$0xff]
    %v45 = vld [vmem:[%s3 + $0x68] sm:$0xff]
    %v46 = vld [vmem:[%s3 + $0x70] sm:$0xff]
    %v47 = vld [vmem:[%s3 + $0x78] sm:$0xff]
    %v48 = vld [vmem:[%s5] sm:$0xff]
    %v49 = vld [vmem:[%s5 + $0x8] sm:$0xff]
    %v50 = vld [vmem:[%s5 + $0x10] sm:$0xff]
    %v51 = vld [vmem:[%s5 + $0x18] sm:$0xff]
    %v52 = vld [vmem:[%s5 + $0x20] sm:$0xff]
    %v53 = vld [vmem:[%s5 + $0x28] sm:$0xff]
    %v54 = vld [vmem:[%s5 + $0x30] sm:$0xff]
    %v55 = vld [vmem:[%s5 + $0x38] sm:$0xff]
    %v56 = vld [vmem:[%s2] sm:$0x1]
    %v57 = vld [vmem:[%s4] sm:$0x1]
    %v58 = vld [vmem:[%s6] sm:$0x1]
    %v60 = vlaneseq
    %v61 = vshrl.u32 %v60, 7
    %v62 = vsub.s32 0, %v61
    %v63 = vrot.slane %v56, %v62
    %vm65 = vcmask 261120
    %v67 = vsel %vm65, %v27, 0
    %69 = vmatprep.subr.mxu0 0.0
    %70 = vmatpush1.msra.mxu0 0.0
    %71 = vmatprep.subr.mxu0 0.0
    %72 = vmatpush1.msra.mxu0 0.0
    %73 = vmatprep.subr.mxu0 0.0
    %74 = vmatpush1.msra.mxu0 0.0
    %75 = vmatprep.subr.mxu0 0.0
    %76 = vmatpush1.msra.mxu0 0.0
    %77 = vmatprep.subr.mxu0 0.0
    %78 = vmatpush1.msra.mxu0 0.0
    %79 = vmatprep.subr.mxu0 0.0
    %80 = vmatpush1.msra.mxu0 0.0
    %81 = vmatprep.subr.mxu0 0.0
    %82 = vmatpush1.msra.mxu0 0.0
    %83 = vmatprep.subr.mxu0 0.0
    %84 = vmatpush1.msra.mxu0 0.0
    %85 = vmatprep.subr.mxu0 0.0
    %86 = vmatpush1.msra.mxu0 0.0
    %87 = vmatprep.subr.mxu0 0.0
    %88 = vmatpush1.msra.mxu0 0.0
    %89 = vmatprep.subr.mxu0 0.0
    %90 = vmatpush1.msra.mxu0 0.0
    %91 = vmatprep.subr.mxu0 0.0
    %92 = vmatpush1.msra.mxu0 0.0
    %93 = vmatprep.subr.mxu0 0.0
    %94 = vmatpush1.msra.mxu0 %v31
    %95 = vmatprep.subr.mxu0 0.0
    %96 = vmatpush1.msra.mxu0 %v30
    %97 = vmatprep.subr.mxu0 0.0
    %98 = vmatpush1.msra.mxu0 %v29
    %99 = vmatprep.subr.mxu0 0.0
    %100 = vmatpush1.msra.mxu0 %v28
    %101 = vmatprep.subr.mxu0 0.0
    %102 = vmatpush2.msra.mxu0 0.0
    %103 = vmatprep.subr.mxu0 0.0
    %104 = vmatpush2.msra.mxu0 0.0
    %105 = vmatprep.subr.mxu0 0.0
    %106 = vmatpush2.msra.mxu0 0.0
    %107 = vmatprep.subr.mxu0 0.0
    %108 = vmatpush2.msra.mxu0 0.0
    %109 = vmatprep.subr.mxu0 0.0
    %110 = vmatpush2.msra.mxu0 0.0
    %111 = vmatprep.subr.mxu0 0.0
    %112 = vmatpush2.msra.mxu0 0.0
    %113 = vmatprep.subr.mxu0 0.0
    %114 = vmatpush2.msra.mxu0 0.0
    %115 = vmatprep.subr.mxu0 0.0
    %116 = vmatpush2.msra.mxu0 0.0
    %117 = vmatprep.subr.mxu0 0.0
    %118 = vmatpush2.msra.mxu0 0.0
    %119 = vmatprep.subr.mxu0 0.0
    %120 = vmatpush2.msra.mxu0 0.0
    %121 = vmatprep.subr.mxu0 0.0
    %122 = vmatpush2.msra.mxu0 0.0
    %123 = vmatprep.subr.mxu0 0.0
    %124 = vmatpush2.msra.mxu0 0.0
    %125 = vmatprep.subr.mxu0 0.0
    %126 = vmatpush2.msra.mxu0 0.0
    %127 = vmatprep.subr.mxu0 0.0
    %128 = vmatpush2.msra.mxu0 0.0
    %129 = vmatprep.subr.mxu0 0.0
    %130 = vmatpush2.msra.mxu0 0.0
    %131 = vmatprep.subr.mxu0 0.0
    %132 = vmatpush2.msra.mxu0 0.0
    %133 = vmatprep.mubr.f32.mxu0 0.0
    %134 = vmatmul.mubr.f32.gmra.mxu0 %v67
    %v135 = vpop.f32.mrf.mxu0
    %v136 = vadd.f32 %v63, %v135
    %v137 = vpop.f32.mrf.mxu0
    %138 = vdwg.mxu0
    %v139 = vmin.f32 %v136, 20.0
    %v140 = vmul.f32 %v139, 1.442695
    %v141 = vpow.pop %v140
    %v142 = vadd.f32 %v141, 1.0
    %v143 = vmul.f32 %v142, %v142
    %v144 = vsub.f32 %v143, 1.0
    %v145 = vmul.f32 %v136, %v144
    %v146 = vadd.f32 %v143, 1.0
    %v147 = vrcp.pop %v146
    %v148 = vmul.f32 %v145, %v147
    %v150 = vlaneseq
    %v151 = vshrl.u32 %v150, 7
    %v152 = vsub.s32 0, %v151
    %v153 = vrot.slane %v57, %v152
    %155 = vmatprep.subr.mxu0 0.0
    %156 = vmatpush1.msra.mxu0 %v47
    %157 = vmatprep.subr.mxu0 0.0
    %158 = vmatpush1.msra.mxu0 %v46
    %159 = vmatprep.subr.mxu0 0.0
    %160 = vmatpush1.msra.mxu0 %v45
    %161 = vmatprep.subr.mxu0 0.0
    %162 = vmatpush1.msra.mxu0 %v44
    %163 = vmatprep.subr.mxu0 0.0
    %164 = vmatpush1.msra.mxu0 %v43
    %165 = vmatprep.subr.mxu0 0.0
    %166 = vmatpush1.msra.mxu0 %v42
    %167 = vmatprep.subr.mxu0 0.0
    %168 = vmatpush1.msra.mxu0 %v41
    %169 = vmatprep.subr.mxu0 0.0
    %170 = vmatpush1.msra.mxu0 %v40
    %171 = vmatprep.subr.mxu0 0.0
    %172 = vmatpush1.msra.mxu0 %v39
    %173 = vmatprep.subr.mxu0 0.0
    %174 = vmatpush1.msra.mxu0 %v38
    %175 = vmatprep.subr.mxu0 0.0
    %176 = vmatpush1.msra.mxu0 %v37
    %177 = vmatprep.subr.mxu0 0.0
    %178 = vmatpush1.msra.mxu0 %v36
    %179 = vmatprep.subr.mxu0 0.0
    %180 = vmatpush1.msra.mxu0 %v35
    %181 = vmatprep.subr.mxu0 0.0
    %182 = vmatpush1.msra.mxu0 %v34
    %183 = vmatprep.subr.mxu0 0.0
    %184 = vmatpush1.msra.mxu0 %v33
    %185 = vmatprep.subr.mxu0 0.0
    %186 = vmatpush1.msra.mxu0 %v32
    %187 = vmatprep.subr.mxu0 0.0
    %188 = vmatpush2.msra.mxu0 0.0
    %189 = vmatprep.subr.mxu0 0.0
    %190 = vmatpush2.msra.mxu0 0.0
    %191 = vmatprep.subr.mxu0 0.0
    %192 = vmatpush2.msra.mxu0 0.0
    %193 = vmatprep.subr.mxu0 0.0
    %194 = vmatpush2.msra.mxu0 0.0
    %195 = vmatprep.subr.mxu0 0.0
    %196 = vmatpush2.msra.mxu0 0.0
    %197 = vmatprep.subr.mxu0 0.0
    %198 = vmatpush2.msra.mxu0 0.0
    %199 = vmatprep.subr.mxu0 0.0
    %200 = vmatpush2.msra.mxu0 0.0
    %201 = vmatprep.subr.mxu0 0.0
    %202 = vmatpush2.msra.mxu0 0.0
    %203 = vmatprep.subr.mxu0 0.0
    %204 = vmatpush2.msra.mxu0 0.0
    %205 = vmatprep.subr.mxu0 0.0
    %206 = vmatpush2.msra.mxu0 0.0
    %207 = vmatprep.subr.mxu0 0.0
    %208 = vmatpush2.msra.mxu0 0.0
    %209 = vmatprep.subr.mxu0 0.0
    %210 = vmatpush2.msra.mxu0 0.0
    %211 = vmatprep.subr.mxu0 0.0
    %212 = vmatpush2.msra.mxu0 0.0
    %213 = vmatprep.subr.mxu0 0.0
    %214 = vmatpush2.msra.mxu0 0.0
    %215 = vmatprep.subr.mxu0 0.0
    %216 = vmatpush2.msra.mxu0 0.0
    %217 = vmatprep.subr.mxu0 0.0
    %218 = vmatpush2.msra.mxu0 0.0
    %219 = vmatprep.mubr.f32.mxu0 0.0
    %220 = vmatmul.mubr.f32.gmra.mxu0 %v148
    %v221 = vpop.f32.mrf.mxu0
    %v222 = vadd.f32 %v153, %v221
    %v223 = vpop.f32.mrf.mxu0
    %224 = vdwg.mxu0
    %v225 = vmin.f32 %v222, 20.0
    %v226 = vmul.f32 %v225, 1.442695
    %v227 = vpow.pop %v226
    %v228 = vadd.f32 %v227, 1.0
    %v229 = vmul.f32 %v228, %v228
    %v230 = vsub.f32 %v229, 1.0
    %v231 = vmul.f32 %v222, %v230
    %v232 = vadd.f32 %v229, 1.0
    %v233 = vrcp.pop %v232
    %v234 = vmul.f32 %v231, %v233
    %v236 = vlaneseq
    %v237 = vshrl.u32 %v236, 7
    %v238 = vsub.s32 0, %v237
    %v239 = vrot.slane %v58, %v238
    %vm241 = vcmask 523264
    %v243 = vsel %vm241, %v234, 0
    %245 = vmatprep.subr.mxu0 0.0
    %246 = vmatpush1.msra.mxu0 0.0
    %247 = vmatprep.subr.mxu0 0.0
    %248 = vmatpush1.msra.mxu0 0.0
    %249 = vmatprep.subr.mxu0 0.0
    %250 = vmatpush1.msra.mxu0 0.0
    %251 = vmatprep.subr.mxu0 0.0
    %252 = vmatpush1.msra.mxu0 0.0
    %253 = vmatprep.subr.mxu0 0.0
    %254 = vmatpush1.msra.mxu0 0.0
    %255 = vmatprep.subr.mxu0 0.0
    %256 = vmatpush1.msra.mxu0 0.0
    %257 = vmatprep.subr.mxu0 0.0
    %258 = vmatpush1.msra.mxu0 0.0
    %259 = vmatprep.subr.mxu0 0.0
    %260 = vmatpush1.msra.mxu0 0.0
    %261 = vmatprep.subr.mxu0 0.0
    %262 = vmatpush1.msra.mxu0 %v55
    %263 = vmatprep.subr.mxu0 0.0
    %264 = vmatpush1.msra.mxu0 %v54
    %265 = vmatprep.subr.mxu0 0.0
    %266 = vmatpush1.msra.mxu0 %v53
    %267 = vmatprep.subr.mxu0 0.0
    %268 = vmatpush1.msra.mxu0 %v52
    %269 = vmatprep.subr.mxu0 0.0
    %270 = vmatpush1.msra.mxu0 %v51
    %271 = vmatprep.subr.mxu0 0.0
    %272 = vmatpush1.msra.mxu0 %v50
    %273 = vmatprep.subr.mxu0 0.0
    %274 = vmatpush1.msra.mxu0 %v49
    %275 = vmatprep.subr.mxu0 0.0
    %276 = vmatpush1.msra.mxu0 %v48
    %277 = vmatprep.subr.mxu0 0.0
    %278 = vmatpush2.msra.mxu0 0.0
    %279 = vmatprep.subr.mxu0 0.0
    %280 = vmatpush2.msra.mxu0 0.0
    %281 = vmatprep.subr.mxu0 0.0
    %282 = vmatpush2.msra.mxu0 0.0
    %283 = vmatprep.subr.mxu0 0.0
    %284 = vmatpush2.msra.mxu0 0.0
    %285 = vmatprep.subr.mxu0 0.0
    %286 = vmatpush2.msra.mxu0 0.0
    %287 = vmatprep.subr.mxu0 0.0
    %288 = vmatpush2.msra.mxu0 0.0
    %289 = vmatprep.subr.mxu0 0.0
    %290 = vmatpush2.msra.mxu0 0.0
    %291 = vmatprep.subr.mxu0 0.0
    %292 = vmatpush2.msra.mxu0 0.0
    %293 = vmatprep.subr.mxu0 0.0
    %294 = vmatpush2.msra.mxu0 0.0
    %295 = vmatprep.subr.mxu0 0.0
    %296 = vmatpush2.msra.mxu0 0.0
    %297 = vmatprep.subr.mxu0 0.0
    %298 = vmatpush2.msra.mxu0 0.0
    %299 = vmatprep.subr.mxu0 0.0
    %300 = vmatpush2.msra.mxu0 0.0
    %301 = vmatprep.subr.mxu0 0.0
    %302 = vmatpush2.msra.mxu0 0.0
    %303 = vmatprep.subr.mxu0 0.0
    %304 = vmatpush2.msra.mxu0 0.0
    %305 = vmatprep.subr.mxu0 0.0
    %306 = vmatpush2.msra.mxu0 0.0
    %307 = vmatprep.subr.mxu0 0.0
    %308 = vmatpush2.msra.mxu0 0.0
    %309 = vmatprep.mubr.f32.mxu0 0.0
    %310 = vmatmul.mubr.f32.gmra.mxu0 %v243
    %v311 = vpop.f32.mrf.mxu0
    %v312 = vadd.f32 %v239, %v311
    %v313 = vpop.f32.mrf.mxu0
    %314 = vdwg.mxu0
    %v315 = vtanh.pop %v312
    %vm316 = vcmask 130048
    %317 = vst.msk [vmem:[#allocation2] sm:$0xff] %vm316, %v315
    // Predicated region
    $region30: #{tpu_custom_call.1} parent=1 // pred_check
      _
    $region31: #{tpu_custom_call.1} parent=1 // pred_check_branch
      %319 = sbr.rel (0) target = $region33
    $region32: #{tpu_custom_call.1} parent=1 // pred_region
      %s321 = ssub.s32 128, 128
      %322 = vsyncadd [#allocation3], %s321
      %s324 = sshll.u32 [#allocation2], 4
      %s325 = int_to_ptr.vmem [resolvable:$true] %s324
      %327 = dma.vmem_to_hbm [thread:$0]  %s325, 128, %s7, [#allocation3]
    $region33: #{tpu_custom_call.1} parent=1 // pred_fallthru
      _
    // Predicated region
    $region34: #{tpu_custom_call.1} parent=1 // pred_check
      _
    $region35: #{tpu_custom_call.1} parent=1 // pred_check_branch
      %329 = sbr.rel (0) target = $region37
    $region36: #{tpu_custom_call.1} parent=1 // pred_region
      %330 = dma.done [#allocation3], 128
    $region37: #{tpu_custom_call.1} parent=1 // pred_fallthru
      _
    %331 = vsyncpa [#allocation3], 1

</llo_original>
